<compile_context>
chip_gen: v6e
topology: v6e:2x2x1
jax: 0.10.0
libtpu: 0.0.40
codegen_flags: <defaults>
</compile_context>

<pallas_src>
import functools

import jax
import jax.numpy as jnp
from jax.experimental import pallas as pl
from jax.experimental.pallas import tpu as pltpu

_LANE = 128
_SUBLANE = 8
_BLOCK_BYTES = 4 * 1024 * 1024      # per input buffer (pipeline multi-buffers it)
_MAX_TILE_ROWS = 2048               # bounds scratch & keeps the grid multi-step
_MIN_SPLIT_BYTES = 4 * 1024 * 1024  # above this, force >=2 "parallel" row tiles (v7x)
_FAST_PATH_BYTES = 512 * 1024       # below this, plain XLA reduce beats any kernel


def _round_up(v, m):
    return -(-v // m) * m


def _mask_invalid_rows(val, row_tile_idx, tile_rows, rows_total):
    """Zero rows >= rows_total (ragged last row tile) so discarded rows never
    depend on out-of-bounds / stale VMEM contents."""
    row = jax.lax.broadcasted_iota(jnp.int32, val.shape, 0) + row_tile_idx * tile_rows
    return jnp.where(row < rows_total, val, 0.0)


def _pool_kernel_simple(x_ref, out_ref, *, hw, rows_total, tile_rows, mask_rows):
    """Whole HW extent in one block: reduce along lanes and write directly."""
    x = x_ref[...].astype(jnp.float32)
    mean = jnp.sum(x, axis=-1, keepdims=True) * (1.0 / hw)   # (TM, 1)
    mx = jnp.max(x, axis=-1, keepdims=True)                  # (TM, 1)
    if mask_rows:
        i = pl.program_id(0)
        mean = _mask_invalid_rows(mean, i, tile_rows, rows_total)
        mx = _mask_invalid_rows(mx, i, tile_rows, rows_total)
    # Single fused store (one vst instead of two masked 1-lane partial stores).
    out_ref[...] = jnp.concatenate([mean, mx], axis=1).astype(out_ref.dtype)


def _pool_kernel_chunked(x_ref, out_ref, sum_acc, max_acc, *,
                         hw, hw_chunk, rows_total, tile_rows,
                         mask_rows, mask_lanes):
    """HW split over a second ('arbitrary') grid axis.

    Lane-wide (TM, 128) accumulators are folded with pure VPU add/max; the
    single cross-lane (XLU) reduction happens only in the final chunk.
    """
    i = pl.program_id(0)
    k = pl.program_id(1)

    @pl.when(k == 0)
    def _init():
        sum_acc[...] = jnp.zeros_like(sum_acc)
        max_acc[...] = jnp.full_like(max_acc, -jnp.inf)

    x = x_ref[...].astype(jnp.float32)
    n_seg = hw_chunk // _LANE                    # hw_chunk is a multiple of 128
    s_acc = sum_acc[...]
    m_acc = max_acc[...]
    for j in range(n_seg):                       # static, unrolled; VPU only
        seg = x[:, j * _LANE:(j + 1) * _LANE]
        if mask_lanes:
            # Last HW chunk may be ragged: 0 for sum, -inf for max.
            lane = (jax.lax.broadcasted_iota(jnp.int32, seg.shape, 1)
                    + (k * hw_chunk + j * _LANE))
            valid = lane < hw
            s_acc = s_acc + jnp.where(valid, seg, 0.0)
            m_acc = jnp.maximum(m_acc, jnp.where(valid, seg, -jnp.inf))
        else:
            s_acc = s_acc + seg
            m_acc = jnp.maximum(m_acc, seg)
    sum_acc[...] = s_acc
    max_acc[...] = m_acc

    @pl.when(k == pl.num_programs(1) - 1)
    def _finalize():
        mean = jnp.sum(sum_acc[...], axis=-1, keepdims=True) * (1.0 / hw)
        mx = jnp.max(max_acc[...], axis=-1, keepdims=True)
        if mask_rows:
            mean_m = _mask_invalid_rows(mean, i, tile_rows, rows_total)
            mx_m = _mask_invalid_rows(mx, i, tile_rows, rows_total)
        else:
            mean_m, mx_m = mean, mx
        out_ref[...] = jnp.concatenate([mean_m, mx_m], axis=1).astype(out_ref.dtype)


def _choose_tiling(rows, hw, itemsize):
    """Pick (tile_rows, hw_chunk) under a ~4 MiB-per-buffer VMEM budget."""
    budget_elems = max(_LANE * _SUBLANE, _BLOCK_BYTES // itemsize)
    # Sublane-dim alignment: 8 for f32, 16 for bf16, 32 for int8.
    row_align = max(_SUBLANE, 32 // max(int(itemsize), 1))

    # Keep the full spatial extent in lanes (single contiguous DMA, no
    # reduction grid axis) as long as a row_align-tall tile still fits the
    # budget; only then chunk HW (rare: > ~362x362 spatial for f32).
    if hw <= budget_elems // row_align:
        hw_chunk = hw
    else:
        hw_chunk = max(_LANE, (budget_elems // 256) // _LANE * _LANE)

    max_rows = max(row_align, budget_elems // hw_chunk)
    cap = min(max_rows, _MAX_TILE_ROWS)

    # v7x megacore: rows is the only "parallel" axis; for non-trivial inputs
    # guarantee >= 2 row tiles so both TensorCores stream HBM.
    if rows * hw * itemsize > _MIN_SPLIT_BYTES:
        cap = min(cap, max(row_align, _round_up(pl.cdiv(rows, 2), row_align)))

    if rows <= cap:
        tile_rows = rows   # single exact tile: full-dim block, no divisibility issue
    else:
        tile_rows = max(row_align, cap // row_align * row_align)
    return tile_rows, hw_chunk


def adaptive_concat_pool2d(x, *, use_pallas=None):
    """AdaptiveConcatPool2d(size=None): (N, C, H, W) -> (N, 2C, 1, 1)."""
    n, c, h, w = x.shape
    rows = n * c
    hw = h * w
    itemsize = jnp.dtype(x.dtype).itemsize
    total_bytes = rows * hw * itemsize

    if use_pallas is None:
        use_pallas = total_bytes >= _FAST_PATH_BYTES
    if not use_pallas:
        # Tiny-input fast path: a fused XLA reduce beats kernel launch + glue.
        return jnp.concatenate(
            [jnp.mean(x, axis=(2, 3), keepdims=True),
             jnp.max(x, axis=(2, 3), keepdims=True)], axis=1)

    x2d = x.reshape(rows, hw)          # contiguous reshape, no extra HBM copy

    tile_rows, hw_chunk = _choose_tiling(rows, hw, itemsize)
    n_row_tiles = pl.cdiv(rows, tile_rows)
    n_hw_chunks = pl.cdiv(hw, hw_chunk)
    out_rows = n_row_tiles * tile_rows          # only the tiny output is padded
    mask_rows = (rows % tile_rows) != 0
    mask_lanes = (hw % hw_chunk) != 0

    if n_hw_chunks == 1:
        kernel = functools.partial(
            _pool_kernel_simple,
            hw=hw, rows_total=rows, tile_rows=tile_rows, mask_rows=mask_rows)
        scratch_shapes = ()
    else:
        kernel = functools.partial(
            _pool_kernel_chunked,
            hw=hw, hw_chunk=hw_chunk, rows_total=rows, tile_rows=tile_rows,
            mask_rows=mask_rows, mask_lanes=mask_lanes)
        scratch_shapes = (pltpu.VMEM((tile_rows, _LANE), jnp.float32),
                          pltpu.VMEM((tile_rows, _LANE), jnp.float32))

    # DMA-bound kernel: a third in-flight input buffer hides grid-step bubbles
    # (only worthwhile / legal to fill when there are >= 3 grid steps).
    if n_row_tiles * n_hw_chunks >= 3:
        in_spec = pl.BlockSpec((tile_rows, hw_chunk), lambda i, k: (i, k),
                               pipeline_mode=pl.Buffered(3))
    else:
        in_spec = pl.BlockSpec((tile_rows, hw_chunk), lambda i, k: (i, k))

    out2 = pl.pallas_call(
        kernel,
        out_shape=jax.ShapeDtypeStruct((out_rows, 2), x.dtype),
        grid_spec=pltpu.PrefetchScalarGridSpec(
            num_scalar_prefetch=0,
            grid=(n_row_tiles, n_hw_chunks),
            in_specs=[in_spec],
            out_specs=pl.BlockSpec((tile_rows, 2), lambda i, k: (i, 0)),
            scratch_shapes=scratch_shapes,
        ),
        compiler_params=pltpu.CompilerParams(
            dimension_semantics=("parallel", "arbitrary"),
            vmem_limit_bytes=32 * 1024 * 1024,
        ),
    )(x2d)

    avg = out2[:rows, 0].reshape(n, c, 1, 1)
    mx = out2[:rows, 1].reshape(n, c, 1, 1)
    # torch.cat([avg_pool, max_pool], dim=1)
    return jnp.concatenate([avg, mx], axis=1)


def _reference(x):
    return jnp.concatenate(
        [jnp.mean(x, axis=(2, 3), keepdims=True),
         jnp.max(x, axis=(2, 3), keepdims=True)], axis=1)


if __name__ == "__main__":
    key = jax.random.PRNGKey(0)

    # Small NCHW input: batch=2, channels=4, spatial=16x16.  Forced through
    # the Pallas kernel (the default size heuristic would take the XLA fast
    # path at this size).
    x = jax.random.normal(key, (2, 4, 16, 16), dtype=jnp.float32)
    out = jax.block_until_ready(adaptive_concat_pool2d(x, use_pallas=True))
    ref = _reference(x)
    assert out.shape == (2, 8, 1, 1), out.shape
    assert jnp.allclose(out, ref, atol=1e-5, rtol=1e-5), "mismatch vs reference"

    # Default heuristic (fast path) agrees too.
    out_fast = jax.block_until_ready(adaptive_concat_pool2d(x))
    assert jnp.allclose(out_fast, ref, atol=1e-5, rtol=1e-5)

    # Multi-row-tile case with a ragged last tile (exercises the row masking).
    x2 = jax.random.normal(jax.random.PRNGKey(1), (1, 2500, 3, 3), dtype=jnp.float32)
    out2 = jax.block_until_ready(adaptive_concat_pool2d(x2, use_pallas=True))
    ref2 = _reference(x2)
    assert out2.shape == (1, 5000, 1, 1), out2.shape
    assert jnp.allclose(out2, ref2, atol=1e-5, rtol=1e-5), "mismatch vs reference (ragged)"

    print("KERNEL_OK")
</pallas_src>

<mosaic_0001>
module attributes {stable_mosaic.version = 11 : i64} {
  func.func @_pool_kernel_simple(%arg0: i32, %arg1: i32, %arg2: memref<8x256xf32, #tpu.memory_space<vmem>>, %arg3: memref<8x2xf32, #tpu.memory_space<vmem>>) attributes {dimension_semantics = [#tpu.dimension_semantics<parallel>, #tpu.dimension_semantics<arbitrary>], iteration_bounds = array<i64: 1, 1>, scalar_prefetch = 0 : i64, scratch_operands = 0 : i64, tpu.core_type = #tpu.core_type<tc>, window_params = [{transform_indices = @transform_0, window_bounds = array<i64: 8, 256>}, {transform_indices = @transform_1, window_bounds = array<i64: 8, 2>}]} {
    %c0 = arith.constant 0 : index
    %c0_0 = arith.constant 0 : index
    %0 = vector.load %arg2[%c0, %c0_0] : memref<8x256xf32, #tpu.memory_space<vmem>>, vector<8x256xf32>
    %cst = arith.constant dense<0.000000e+00> : vector<8xf32>
    %1 = vector.multi_reduction <add>, %0, %cst [1] : vector<8x256xf32> to vector<8xf32>
    %2 = vector.shape_cast %1 : vector<8xf32> to vector<8x1xf32>
    %cst_1 = arith.constant 3.906250e-03 : f32
    %3 = vector.broadcast %cst_1 : f32 to vector<8x1xf32>
    %4 = arith.mulf %2, %3 : vector<8x1xf32>
    %cst_2 = arith.constant dense<0xFF800000> : vector<8xf32>
    %5 = vector.multi_reduction <maximumf>, %0, %cst_2 [1] : vector<8x256xf32> to vector<8xf32>
    %6 = vector.shape_cast %5 : vector<8xf32> to vector<8x1xf32>
    %7 = tpu.concatenate %4, %6 in 1 : vector<8x1xf32>, vector<8x1xf32> -> vector<8x2xf32>
    %c0_3 = arith.constant 0 : index
    %c0_4 = arith.constant 0 : index
    %8 = vector.load %arg3[%c0_3, %c0_4] : memref<8x2xf32, #tpu.memory_space<vmem>>, vector<8x2xf32>
    tpu.vector_store %arg3[%c0_3, %c0_4], %7 {strides = array<i32>} : memref<8x2xf32, #tpu.memory_space<vmem>>, vector<8x2xf32>,
    return
  }
  func.func @transform_0(%arg0: i32, %arg1: i32) -> (i32, i32) {
    %c0_i32 = arith.constant 0 : i32
    return %arg0, %arg1 : i32, i32
  }
  func.func @transform_1(%arg0: i32, %arg1: i32) -> (i32, i32) {
    %c0_i32 = arith.constant 0 : i32
    %c0_i32_0 = arith.constant 0 : i32
    return %arg0, %c0_i32 : i32, i32
  }
}

</mosaic_0001>

<llo_original>
// kernel: tpu_custom_call.1
$region0: #{tpu_custom_call.1}
  #allocation0 [shape = 'u32[]', space=smem, size = 0x4, offset = 0x4, fixed_abs, tag = 'smem constant byte address 0x4 - core index']
  #allocation1 [shape = 'u32[144,128]{1,0:T(1,128)}', space=vmem, size = 0x12000, scoped, tag = 'internal scratch']
  %s0 = inlined_call_operand.hbm [shape: f32[8,256], index: 0, kind: input, shape index: {}]
  %s1 = inlined_call_operand.vmem [shape: f32[8,2], index: 1, kind: output, shape index: {}]
  %s2 = sld [smem:[#allocation0]]
  $region18: #{tpu_custom_call.1} parent=0
    _
  %s4 = ssub.s32 1, %s2
  %s5 = scalar_select 0, %s4, %s2
  $region1: #{tpu_custom_call.1} parent=0
    #allocation2 [shape = 'u8[8192]{0}', space=vmem, size = 0x2000, scoped, tag = 'input window, operand 0, single buffered']
    #allocation3 [shape = 's32[1]{0}', space=sflag, size = 0x4, scoped, tag = 'scoped memory for tpu_custom_call.1']
    %6 = vsyncpa [#allocation3], 0
    // Predicated region
    $region2: #{tpu_custom_call.1} parent=1 // pred_check
      _
    $region3: #{tpu_custom_call.1} parent=1 // pred_check_branch
      %8 = sbr.rel (0) target = $region5
    $region4: #{tpu_custom_call.1} parent=1 // pred_region
      %s10 = ssub.s32 256, 256
      %11 = vsyncadd [#allocation3], %s10
      %s13 = sshll.u32 [#allocation2], 4
      %s14 = int_to_ptr.vmem [resolvable:$true] %s13
      %16 = dma.hbm_to_vmem [thread:$0]  %s0, 256, %s14, [#allocation3]
    $region5: #{tpu_custom_call.1} parent=1 // pred_fallthru
      _
    // Predicated region
    $region6: #{tpu_custom_call.1} parent=1 // pred_check
      _
    $region7: #{tpu_custom_call.1} parent=1 // pred_check_branch
      %18 = sbr.rel (0) target = $region9
    $region8: #{tpu_custom_call.1} parent=1 // pred_region
      %19 = dma.done [#allocation3], 256
    $region9: #{tpu_custom_call.1} parent=1 // pred_fallthru
      _
    %v20 = vld [vmem:[#allocation2] sm:$0xff]
    %v21 = vld [vmem:[#allocation2 + $0x8] sm:$0xff]
    %v22 = vadd.f32 %v20, %v21
    %23 = vadd.xlane.f32.xlu0 %v22
    %v24 = vpop.xlane.xlu0 %23
    %v25 = vmul.f32 %v24, 0.00390625
    %v26 = vmax.f32 %v20, %v21
    %27 = vmax.xlane.f32.xlu0 %v26
    %v28 = vpop.xlane.xlu0 %27
    %vm29 = vcmask 7168
    %v30 = vsel %vm29, %v25, %v28
    %vm31 = vcmask 15360
    %32 = vst.msk [vmem:[%s1] sm:$0xff] %vm31, %v30
    // Predicated region
    $region10: #{tpu_custom_call.1} parent=1 // pred_check
      _
    $region11: #{tpu_custom_call.1} parent=1 // pred_check_branch
      %34 = sbr.rel (0) target = $region13
    $region12: #{tpu_custom_call.1} parent=1 // pred_region
      _
    $region13: #{tpu_custom_call.1} parent=1 // pred_fallthru
      _
    // Predicated region
    $region14: #{tpu_custom_call.1} parent=1 // pred_check
      _
    $region15: #{tpu_custom_call.1} parent=1 // pred_check_branch
      %36 = sbr.rel (0) target = $region17
    $region16: #{tpu_custom_call.1} parent=1 // pred_region
      _
    $region17: #{tpu_custom_call.1} parent=1 // pred_fallthru
      _
    %37 = vsyncpa [#allocation3], 1

</llo_original>
